<compile_context>
chip_gen: v7x
topology: tpu7x:2x2x1
jax: 0.10.0
libtpu: 0.0.40
codegen_flags: <defaults>
</compile_context>

<pallas_src>
import jax
import jax.numpy as jnp
from jax import lax
from jax.experimental import pallas as pl
from jax.experimental.pallas import tpu as pltpu

_NEG_INF = -1e30  # bias for padded aspect columns -> exp() underflows to exactly 0


def _round_up(x, m):
    return ((x + m - 1) // m) * m


def aspect_ae_kernel(ids_ref, wemb_ref, wlin_ref, blin_ref, aemb_ref,
                     r_ref, probs_ref):
    # ids_ref : (TB, S)        int32 token ids for this batch tile
    # wemb_ref: (V_pad, E_pad) embedding table (zero-padded), resident block
    # wlin_ref: (A_pad, E_pad) Linear weight in PyTorch layout (zero-padded)
    # blin_ref: (1, A_pad)     Linear bias (-1e30 in padded columns)
    # aemb_ref: (A_pad, E_pad) aspect matrix (zero-padded)
    TB, S = ids_ref.shape
    V = wemb_ref.shape[0]

    ids = ids_ref[...]                                            # (TB, S) int32

    # ---- EmbeddingBag(mode='mean') as one-hot counts + MXU matmul (no gather) ----
    vocab_iota = lax.broadcasted_iota(jnp.int32, (TB, V), 1)      # hoisted once
    counts = jnp.zeros((TB, V), jnp.float32)
    if S <= 64:
        # static unrolled loop over the (small) segment length
        for s in range(S):
            counts = counts + (ids[:, s:s + 1] == vocab_iota).astype(jnp.float32)
    else:
        def body(s, c):
            tok = lax.dynamic_slice_in_dim(ids, s, 1, axis=1)     # (TB, 1)
            return c + (tok == vocab_iota).astype(jnp.float32)
        counts = lax.fori_loop(0, S, body, counts)

    # cast-to-f32 right after load (v5e has no bf16 VPU); MXU accumulates in f32
    w_emb = wemb_ref[...].astype(jnp.float32)                     # (V_pad, E_pad)
    enc = jnp.dot(counts, w_emb,
                  preferred_element_type=jnp.float32) * (1.0 / S)  # (TB, E_pad)

    # ---- Linear(E, A): contract E axes, weight stays in PyTorch (A, E) layout ----
    logits = lax.dot_general(
        enc, wlin_ref[...].astype(jnp.float32),
        dimension_numbers=(((1,), (1,)), ((), ())),
        preferred_element_type=jnp.float32) + blin_ref[...]        # (TB, A_pad)

    # ---- softmax over aspects (padded columns carry -1e30 bias -> prob 0) ----
    m = jnp.max(logits, axis=1, keepdims=True)
    e = jnp.exp(logits - m)
    denom = jnp.sum(e, axis=1, keepdims=True)
    probs = e * pl.reciprocal(denom, approx=True)                  # (TB, A_pad)

    # ---- reconstruction: r = a_probs @ a_emb ----
    r = jnp.dot(probs, aemb_ref[...].astype(jnp.float32),
                preferred_element_type=jnp.float32)                # (TB, E_pad)

    r_ref[...] = r.astype(r_ref.dtype)
    probs_ref[...] = probs.astype(probs_ref.dtype)


def aspect_autoencoder_forward(inputs, w_emb, w_lin, b_lin, a_emb,
                               *, block_b=256, emb_dtype=jnp.float32):
    """inputs: (B, S) int32; w_emb: (V, E); w_lin: (A, E) PyTorch layout; b_lin: (A,);
    a_emb: (A, E).  Returns (r (B, E) f32, a_probs (B, A) f32).

    emb_dtype=jnp.bfloat16 halves HBM traffic for the embedding/aspect tables on
    v6e/v7x (cast back to f32 in-kernel, so v5e stays on f32 elementwise math)."""
    B, S = inputs.shape
    V, E = w_emb.shape
    A = a_emb.shape[0]

    # Lane-dense padded feature sizes (multiples of 128 on the lane axis).
    V_pad = _round_up(V, 128)
    E_pad = _round_up(E, 128)
    A_pad = _round_up(A, 128)

    # Batch tile: multiple of 8 sublanes, capped so the double-buffered id/output
    # blocks + resident tables stay well inside the default scoped VMEM
    # (16 MiB v5e, 32 MiB v6e/v7x; v7x physical VMEM is only 64 MiB).
    TB = min(block_b, _round_up(B, 8))
    B_pad = _round_up(B, TB)

    # TODO(synk): for vocabularies where V_pad*E_pad no longer fits VMEM, keep w_emb
    # in HBM (memory_space=pl.ANY) and DMA-gather the needed rows instead of the
    # one-hot-count matmul.
    ids_p = jnp.pad(inputs.astype(jnp.int32), ((0, B_pad - B), (0, 0)))
    w_emb_p = jnp.pad(w_emb, ((0, V_pad - V), (0, E_pad - E))).astype(emb_dtype)
    w_lin_p = jnp.pad(w_lin, ((0, A_pad - A), (0, E_pad - E)))            # (A_pad, E_pad)
    b_lin_p = jnp.pad(b_lin.reshape(1, A), ((0, 0), (0, A_pad - A)),
                      constant_values=_NEG_INF)                            # (1, A_pad)
    a_emb_p = jnp.pad(a_emb, ((0, A_pad - A), (0, E_pad - E))).astype(emb_dtype)

    grid = (B_pad // TB,)
    grid_spec = pltpu.PrefetchScalarGridSpec(
        num_scalar_prefetch=0,
        grid=grid,
        in_specs=[
            pl.BlockSpec((TB, S), lambda i: (i, 0)),           # token ids (tiled on B)
            pl.BlockSpec((V_pad, E_pad), lambda i: (0, 0)),    # embedding table (resident)
            pl.BlockSpec((A_pad, E_pad), lambda i: (0, 0)),    # Linear weight (resident)
            pl.BlockSpec((1, A_pad), lambda i: (0, 0)),        # Linear bias (resident)
            pl.BlockSpec((A_pad, E_pad), lambda i: (0, 0)),    # aspect matrix (resident)
        ],
        out_specs=[
            pl.BlockSpec((TB, E_pad), lambda i: (i, 0)),       # r (lane-dense, padded)
            pl.BlockSpec((TB, A_pad), lambda i: (i, 0)),       # a_probs (lane-dense, padded)
        ],
    )

    emb_bytes = jnp.dtype(emb_dtype).itemsize
    cost = pl.CostEstimate(
        flops=(2 * B_pad * V_pad * E_pad          # counts @ w_emb
               + 2 * B_pad * E_pad * A_pad        # enc @ W^T
               + 2 * B_pad * A_pad * E_pad        # probs @ a_emb
               + B_pad * S * V_pad),              # one-hot compares/adds
        transcendentals=B_pad * (A_pad + 1),      # exp + reciprocal
        bytes_accessed=(B_pad * S * 4
                        + V_pad * E_pad * emb_bytes
                        + A_pad * E_pad * (4 + emb_bytes) + A_pad * 4
                        + B_pad * (E_pad + A_pad) * 4),
    )

    r_pad, probs_pad = pl.pallas_call(
        aspect_ae_kernel,
        grid_spec=grid_spec,
        out_shape=(
            jax.ShapeDtypeStruct((B_pad, E_pad), jnp.float32),
            jax.ShapeDtypeStruct((B_pad, A_pad), jnp.float32),
        ),
        compiler_params=pltpu.CompilerParams(
            dimension_semantics=("parallel",)),   # v7x: both TensorCores split the batch
        cost_estimate=cost,
    )(ids_p, w_emb_p, w_lin_p, b_lin_p, a_emb_p)

    # Slice off the batch / lane padding in the wrapper (cheap XLA slices).
    return r_pad[:B, :E], probs_pad[:B, :A]


def _xavier_uniform(key, shape):
    fan_in, fan_out = shape[1], shape[0]
    limit = jnp.sqrt(6.0 / (fan_in + fan_out))
    return jax.random.uniform(key, shape, jnp.float32, -limit, limit)


if __name__ == "__main__":
    # Small shapes consistent with the module's forward.
    B, S = 8, 8          # batch, segment length
    V, E = 64, 32        # vocab_size, emb_size
    A = 10               # num_aspects

    key = jax.random.PRNGKey(0)
    k_emb, k_a, k_lw, k_lb, k_in = jax.random.split(key, 5)

    # Deterministic synthetic parameters (shapes follow __init__).
    w_emb = _xavier_uniform(k_emb, (V, E))                       # seg_encoder.weight
    a_emb = _xavier_uniform(k_a, (A, E))                         # aspect matrix
    lin_limit = 1.0 / jnp.sqrt(float(E))
    w_lin = jax.random.uniform(k_lw, (A, E), jnp.float32, -lin_limit, lin_limit)
    b_lin = jax.random.uniform(k_lb, (A,), jnp.float32, -lin_limit, lin_limit)

    inputs = jax.random.randint(k_in, (B, S), 0, V, dtype=jnp.int32)

    r, a_probs = aspect_autoencoder_forward(inputs, w_emb, w_lin, b_lin, a_emb)
    jax.block_until_ready((r, a_probs))

    # Pure-JAX reference of the same forward pass.
    x_wrd = jnp.take(w_emb, inputs, axis=0)
    enc_ref = jnp.mean(x_wrd, axis=1)
    logits_ref = enc_ref @ w_lin.T + b_lin
    probs_ref = jax.nn.softmax(logits_ref, axis=1)
    r_ref = probs_ref @ a_emb

    # Slightly looser tolerance because the in-kernel softmax uses the EUP
    # approximate reciprocal (pl.reciprocal(..., approx=True)).
    assert r.shape == (B, E) and a_probs.shape == (B, A)
    assert jnp.allclose(a_probs, probs_ref, rtol=2e-3, atol=2e-3)
    assert jnp.allclose(r, r_ref, rtol=2e-3, atol=2e-3)

    print("KERNEL_OK")
</pallas_src>

<mosaic_0001>
module attributes {stable_mosaic.version = 11 : i64} {
  func.func @aspect_ae_kernel(%arg0: i32, %arg1: memref<8x8xi32, #tpu.memory_space<vmem>>, %arg2: memref<128x128xf32, #tpu.memory_space<vmem>>, %arg3: memref<128x128xf32, #tpu.memory_space<vmem>>, %arg4: memref<1x128xf32, #tpu.memory_space<vmem>>, %arg5: memref<128x128xf32, #tpu.memory_space<vmem>>, %arg6: memref<8x128xf32, #tpu.memory_space<vmem>>, %arg7: memref<8x128xf32, #tpu.memory_space<vmem>>) attributes {dimension_semantics = [#tpu.dimension_semantics<parallel>], iteration_bounds = array<i64: 1>, scalar_prefetch = 0 : i64, scratch_operands = 0 : i64, tpu.core_type = #tpu.core_type<tc>, window_params = [{transform_indices = @transform_0, window_bounds = array<i64: 8, 8>}, {pipeline_mode = #tpu.pipeline_mode<synchronous>, transform_indices = @transform_1, window_bounds = array<i64: 128, 128>}, {pipeline_mode = #tpu.pipeline_mode<synchronous>, transform_indices = @transform_2, window_bounds = array<i64: 128, 128>}, {pipeline_mode = #tpu.pipeline_mode<synchronous>, transform_indices = @transform_3, window_bounds = array<i64: 1, 128>}, {pipeline_mode = #tpu.pipeline_mode<synchronous>, transform_indices = @transform_4, window_bounds = array<i64: 128, 128>}, {transform_indices = @transform_5, window_bounds = array<i64: 8, 128>}, {transform_indices = @transform_6, window_bounds = array<i64: 8, 128>}]} {
    %c0 = arith.constant 0 : index
    %c0_0 = arith.constant 0 : index
    %0 = vector.load %arg1[%c0, %c0_0] : memref<8x8xi32, #tpu.memory_space<vmem>>, vector<8x8xi32>
    %1 = tpu.iota {dimensions = array<i32: 1>} : vector<8x128xi32>
    %cst = arith.constant 0.000000e+00 : f32
    %2 = vector.broadcast %cst : f32 to vector<8x128xf32>
    %3 = vector.extract_strided_slice %0 {offsets = [0, 0], sizes = [8, 1], strides = [1, 1]} : vector<8x8xi32> to vector<8x1xi32>
    %4 = vector.broadcast %3 : vector<8x1xi32> to vector<8x128xi32>
    %5 = arith.cmpi eq, %4, %1 : vector<8x128xi32>
    %6 = arith.extui %5 : vector<8x128xi1> to vector<8x128xi32>
    %7 = arith.sitofp %6 : vector<8x128xi32> to vector<8x128xf32>
    %8 = arith.addf %2, %7 : vector<8x128xf32>
    %9 = vector.extract_strided_slice %0 {offsets = [0, 1], sizes = [8, 1], strides = [1, 1]} : vector<8x8xi32> to vector<8x1xi32>
    %10 = vector.broadcast %9 : vector<8x1xi32> to vector<8x128xi32>
    %11 = arith.cmpi eq, %10, %1 : vector<8x128xi32>
    %12 = arith.extui %11 : vector<8x128xi1> to vector<8x128xi32>
    %13 = arith.sitofp %12 : vector<8x128xi32> to vector<8x128xf32>
    %14 = arith.addf %8, %13 : vector<8x128xf32>
    %15 = vector.extract_strided_slice %0 {offsets = [0, 2], sizes = [8, 1], strides = [1, 1]} : vector<8x8xi32> to vector<8x1xi32>
    %16 = vector.broadcast %15 : vector<8x1xi32> to vector<8x128xi32>
    %17 = arith.cmpi eq, %16, %1 : vector<8x128xi32>
    %18 = arith.extui %17 : vector<8x128xi1> to vector<8x128xi32>
    %19 = arith.sitofp %18 : vector<8x128xi32> to vector<8x128xf32>
    %20 = arith.addf %14, %19 : vector<8x128xf32>
    %21 = vector.extract_strided_slice %0 {offsets = [0, 3], sizes = [8, 1], strides = [1, 1]} : vector<8x8xi32> to vector<8x1xi32>
    %22 = vector.broadcast %21 : vector<8x1xi32> to vector<8x128xi32>
    %23 = arith.cmpi eq, %22, %1 : vector<8x128xi32>
    %24 = arith.extui %23 : vector<8x128xi1> to vector<8x128xi32>
    %25 = arith.sitofp %24 : vector<8x128xi32> to vector<8x128xf32>
    %26 = arith.addf %20, %25 : vector<8x128xf32>
    %27 = vector.extract_strided_slice %0 {offsets = [0, 4], sizes = [8, 1], strides = [1, 1]} : vector<8x8xi32> to vector<8x1xi32>
    %28 = vector.broadcast %27 : vector<8x1xi32> to vector<8x128xi32>
    %29 = arith.cmpi eq, %28, %1 : vector<8x128xi32>
    %30 = arith.extui %29 : vector<8x128xi1> to vector<8x128xi32>
    %31 = arith.sitofp %30 : vector<8x128xi32> to vector<8x128xf32>
    %32 = arith.addf %26, %31 : vector<8x128xf32>
    %33 = vector.extract_strided_slice %0 {offsets = [0, 5], sizes = [8, 1], strides = [1, 1]} : vector<8x8xi32> to vector<8x1xi32>
    %34 = vector.broadcast %33 : vector<8x1xi32> to vector<8x128xi32>
    %35 = arith.cmpi eq, %34, %1 : vector<8x128xi32>
    %36 = arith.extui %35 : vector<8x128xi1> to vector<8x128xi32>
    %37 = arith.sitofp %36 : vector<8x128xi32> to vector<8x128xf32>
    %38 = arith.addf %32, %37 : vector<8x128xf32>
    %39 = vector.extract_strided_slice %0 {offsets = [0, 6], sizes = [8, 1], strides = [1, 1]} : vector<8x8xi32> to vector<8x1xi32>
    %40 = vector.broadcast %39 : vector<8x1xi32> to vector<8x128xi32>
    %41 = arith.cmpi eq, %40, %1 : vector<8x128xi32>
    %42 = arith.extui %41 : vector<8x128xi1> to vector<8x128xi32>
    %43 = arith.sitofp %42 : vector<8x128xi32> to vector<8x128xf32>
    %44 = arith.addf %38, %43 : vector<8x128xf32>
    %45 = vector.extract_strided_slice %0 {offsets = [0, 7], sizes = [8, 1], strides = [1, 1]} : vector<8x8xi32> to vector<8x1xi32>
    %46 = vector.broadcast %45 : vector<8x1xi32> to vector<8x128xi32>
    %47 = arith.cmpi eq, %46, %1 : vector<8x128xi32>
    %48 = arith.extui %47 : vector<8x128xi1> to vector<8x128xi32>
    %49 = arith.sitofp %48 : vector<8x128xi32> to vector<8x128xf32>
    %50 = arith.addf %44, %49 : vector<8x128xf32>
    %c0_1 = arith.constant 0 : index
    %c0_2 = arith.constant 0 : index
    %51 = vector.load %arg2[%c0_1, %c0_2] : memref<128x128xf32, #tpu.memory_space<vmem>>, vector<128x128xf32>
    %cst_3 = arith.constant dense<0.000000e+00> : vector<8x128xf32>
    %52 = tpu.matmul %50, %51, %cst_3 {dimension_numbers = #tpu.dot_dimension_numbers<[1], [0], [0], [1], [0, 0, 1, 1], [], []>} : vector<8x128xf32>, vector<128x128xf32>, vector<8x128xf32> -> vector<8x128xf32>
    %cst_4 = arith.constant 1.250000e-01 : f32
    %53 = vector.broadcast %cst_4 : f32 to vector<8x128xf32>
    %54 = arith.mulf %52, %53 : vector<8x128xf32>
    %c0_5 = arith.constant 0 : index
    %c0_6 = arith.constant 0 : index
    %55 = vector.load %arg3[%c0_5, %c0_6] : memref<128x128xf32, #tpu.memory_space<vmem>>, vector<128x128xf32>
    %cst_7 = arith.constant dense<0.000000e+00> : vector<8x128xf32>
    %56 = tpu.matmul %54, %55, %cst_7 {dimension_numbers = #tpu.dot_dimension_numbers<[1], [1], [0], [0], [0, 0, 1, 0], [], []>} : vector<8x128xf32>, vector<128x128xf32>, vector<8x128xf32> -> vector<8x128xf32>
    %c0_8 = arith.constant 0 : index
    %c0_9 = arith.constant 0 : index
    %57 = vector.load %arg4[%c0_8, %c0_9] : memref<1x128xf32, #tpu.memory_space<vmem>>, vector<1x128xf32>
    %58 = vector.broadcast %57 : vector<1x128xf32> to vector<8x128xf32>
    %59 = arith.addf %56, %58 : vector<8x128xf32>
    %cst_10 = arith.constant dense<0xFF800000> : vector<8xf32>
    %60 = vector.multi_reduction <maximumf>, %59, %cst_10 [1] : vector<8x128xf32> to vector<8xf32>
    %61 = vector.shape_cast %60 : vector<8xf32> to vector<8x1xf32>
    %62 = vector.broadcast %61 : vector<8x1xf32> to vector<8x128xf32>
    %63 = arith.subf %59, %62 : vector<8x128xf32>
    %64 = math.exp %63 : vector<8x128xf32>
    %cst_11 = arith.constant dense<0.000000e+00> : vector<8xf32>
    %65 = vector.multi_reduction <add>, %64, %cst_11 [1] : vector<8x128xf32> to vector<8xf32>
    %66 = vector.shape_cast %65 : vector<8xf32> to vector<8x1xf32>
    %67 = tpu.reciprocal %66 {approx = true} : vector<8x1xf32> -> vector<8x1xf32>
    %68 = vector.broadcast %67 : vector<8x1xf32> to vector<8x128xf32>
    %69 = arith.mulf %64, %68 : vector<8x128xf32>
    %c0_12 = arith.constant 0 : index
    %c0_13 = arith.constant 0 : index
    %70 = vector.load %arg5[%c0_12, %c0_13] : memref<128x128xf32, #tpu.memory_space<vmem>>, vector<128x128xf32>
    %cst_14 = arith.constant dense<0.000000e+00> : vector<8x128xf32>
    %71 = tpu.matmul %69, %70, %cst_14 {dimension_numbers = #tpu.dot_dimension_numbers<[1], [0], [0], [1], [0, 0, 1, 1], [], []>} : vector<8x128xf32>, vector<128x128xf32>, vector<8x128xf32> -> vector<8x128xf32>
    %c0_15 = arith.constant 0 : index
    %c0_16 = arith.constant 0 : index
    %72 = vector.load %arg6[%c0_15, %c0_16] : memref<8x128xf32, #tpu.memory_space<vmem>>, vector<8x128xf32>
    tpu.vector_store %arg6[%c0_15, %c0_16], %71 {strides = array<i32>} : memref<8x128xf32, #tpu.memory_space<vmem>>, vector<8x128xf32>,
    %c0_17 = arith.constant 0 : index
    %c0_18 = arith.constant 0 : index
    %73 = vector.load %arg7[%c0_17, %c0_18] : memref<8x128xf32, #tpu.memory_space<vmem>>, vector<8x128xf32>
    tpu.vector_store %arg7[%c0_17, %c0_18], %69 {strides = array<i32>} : memref<8x128xf32, #tpu.memory_space<vmem>>, vector<8x128xf32>,
    return
  }
  func.func @transform_0(%arg0: i32) -> (i32, i32) {
    %c0_i32 = arith.constant 0 : i32
    %c0_i32_0 = arith.constant 0 : i32
    return %arg0, %c0_i32 : i32, i32
  }
  func.func @transform_1(%arg0: i32) -> (i32, i32) {
    %c0_i32 = arith.constant 0 : i32
    %c0_i32_0 = arith.constant 0 : i32
    %c0_i32_1 = arith.constant 0 : i32
    return %c0_i32, %c0_i32_0 : i32, i32
  }
  func.func @transform_2(%arg0: i32) -> (i32, i32) {
    %c0_i32 = arith.constant 0 : i32
    %c0_i32_0 = arith.constant 0 : i32
    %c0_i32_1 = arith.constant 0 : i32
    return %c0_i32, %c0_i32_0 : i32, i32
  }
  func.func @transform_3(%arg0: i32) -> (i32, i32) {
    %c0_i32 = arith.constant 0 : i32
    %c0_i32_0 = arith.constant 0 : i32
    %c0_i32_1 = arith.constant 0 : i32
    return %c0_i32, %c0_i32_0 : i32, i32
  }
  func.func @transform_4(%arg0: i32) -> (i32, i32) {
    %c0_i32 = arith.constant 0 : i32
    %c0_i32_0 = arith.constant 0 : i32
    %c0_i32_1 = arith.constant 0 : i32
    return %c0_i32, %c0_i32_0 : i32, i32
  }
  func.func @transform_5(%arg0: i32) -> (i32, i32) {
    %c0_i32 = arith.constant 0 : i32
    %c0_i32_0 = arith.constant 0 : i32
    return %arg0, %c0_i32 : i32, i32
  }
  func.func @transform_6(%arg0: i32) -> (i32, i32) {
    %c0_i32 = arith.constant 0 : i32
    %c0_i32_0 = arith.constant 0 : i32
    return %arg0, %c0_i32 : i32, i32
  }
}

</mosaic_0001>

<llo_original>
// kernel: tpu_custom_call.1
$region0: #{tpu_custom_call.1}
  #allocation0 [shape = 'u32[]', space=smem, size = 0x4, offset = 0x4, fixed_abs, tag = 'smem constant byte address 0x4 - core index']
  #allocation1 [shape = 'u32[144,128]{1,0:T(1,128)}', space=vmem, size = 0x12000, scoped, tag = 'internal scratch']
  %s0 = inlined_call_operand.hbm [shape: s32[8,8], index: 0, kind: input, shape index: {}]
  %s1 = inlined_call_operand.hbm [shape: f32[128,128], index: 1, kind: input, shape index: {}]
  %s2 = inlined_call_operand.hbm [shape: f32[128,128], index: 2, kind: input, shape index: {}]
  %s3 = inlined_call_operand.vmem [shape: f32[1,128], index: 3, kind: input, shape index: {}]
  %s4 = inlined_call_operand.hbm [shape: f32[128,128], index: 4, kind: input, shape index: {}]
  %s5 = inlined_call_operand.hbm [shape: f32[8,128], index: 5, kind: output, shape index: {0}]
  %s6 = inlined_call_operand.hbm [shape: f32[8,128], index: 6, kind: output, shape index: {1}]
  %7 = xla_tuple %s5, %s6
  %s8 = sld [smem:[#allocation0]]
  $region54: #{tpu_custom_call.1} parent=0
    _
  %s10 = ssub.s32 1, %s8
  %s11 = scalar_select 0, %s10, %s8
  $region1: #{tpu_custom_call.1} parent=0
    #allocation2 [shape = 'u8[4096]{0}', space=vmem, size = 0x1000, scoped, tag = 'input window, operand 0, single buffered']
    #allocation3 [shape = 's32[1]{0}', space=sflag, size = 0x4, scoped, tag = 'scoped memory for tpu_custom_call.1']
    #allocation4 [shape = 's32[1]{0}', space=sflag, size = 0x4, scoped, tag = 'scoped memory for tpu_custom_call.1']
    #allocation5 [shape = 'u8[65536]{0}', space=vmem, size = 0x10000, scoped, tag = 'input window, operand 1, single buffered']
    #allocation6 [shape = 's32[1]{0}', space=sflag, size = 0x4, scoped, tag = 'scoped memory for tpu_custom_call.1']
    #allocation7 [shape = 'u8[65536]{0}', space=vmem, size = 0x10000, scoped, tag = 'input window, operand 2, single buffered']
    #allocation8 [shape = 'u8[65536]{0}', space=vmem, size = 0x10000, scoped, tag = 'input window, operand 4, single buffered']
    #allocation9 [shape = 's32[1]{0}', space=sflag, size = 0x4, scoped, tag = 'scoped memory for tpu_custom_call.1']
    #allocation10 [shape = 'u8[4096]{0}', space=vmem, size = 0x1000, scoped, tag = 'output window, operand 0, single buffered']
    #allocation11 [shape = 'u8[4096]{0}', space=vmem, size = 0x1000, scoped, tag = 'output window, operand 1, single buffered']
    #allocation12 [shape = 's32[1]{0}', space=sflag, size = 0x4, scoped, tag = 'scoped memory for tpu_custom_call.1']
    %12 = vsyncpa [#allocation3], 0
    %13 = vsyncpa [#allocation6], 0
    %14 = vsyncpa [#allocation9], 0
    %15 = vsyncpa [#allocation4], 0
    %16 = vsyncpa [#allocation12], 0
    // Predicated region
    $region2: #{tpu_custom_call.1} parent=1 // pred_check
      _
    $region3: #{tpu_custom_call.1} parent=1 // pred_check_branch
      %18 = sbr.rel (0) target = $region5
    $region4: #{tpu_custom_call.1} parent=1 // pred_region
      %s20 = ssub.s32 128, 128
      %21 = vsyncadd [#allocation3], %s20
      %s23 = sshll.u32 [#allocation2], 4
      %s24 = int_to_ptr.vmem [resolvable:$true] %s23
      %26 = dma.hbm_to_vmem [thread:$0]  %s0, 128, %s24, [#allocation3]
    $region5: #{tpu_custom_call.1} parent=1 // pred_fallthru
      _
    // Predicated region
    $region6: #{tpu_custom_call.1} parent=1 // pred_check
      _
    $region7: #{tpu_custom_call.1} parent=1 // pred_check_branch
      %28 = sbr.rel (0) target = $region9
    $region8: #{tpu_custom_call.1} parent=1 // pred_region
      %s30 = ssub.s32 2048, 2048
      %31 = vsyncadd [#allocation6], %s30
      %s32 = sshll.u32 [#allocation5], 4
      %s33 = int_to_ptr.vmem [resolvable:$true] %s32
      %38 = dma.hbm_to_vmem [thread:$0]  %s1, 2048, %s33, [#allocation6], 128, 128, 8
    $region9: #{tpu_custom_call.1} parent=1 // pred_fallthru
      _
    // Predicated region
    $region10: #{tpu_custom_call.1} parent=1 // pred_check
      _
    $region11: #{tpu_custom_call.1} parent=1 // pred_check_branch
      %40 = sbr.rel (0) target = $region13
    $region12: #{tpu_custom_call.1} parent=1 // pred_region
      %s42 = ssub.s32 2048, 2048
      %43 = vsyncadd [#allocation6], %s42
      %s44 = sshll.u32 [#allocation7], 4
      %s45 = int_to_ptr.vmem [resolvable:$true] %s44
      %50 = dma.hbm_to_vmem [thread:$0]  %s2, 2048, %s45, [#allocation6], 128, 128, 8
    $region13: #{tpu_custom_call.1} parent=1 // pred_fallthru
      _
    // Predicated region
    $region14: #{tpu_custom_call.1} parent=1 // pred_check
      _
    $region15: #{tpu_custom_call.1} parent=1 // pred_check_branch
      %52 = sbr.rel (0) target = $region17
    $region16: #{tpu_custom_call.1} parent=1 // pred_region
      _
    $region17: #{tpu_custom_call.1} parent=1 // pred_fallthru
      _
    // Predicated region
    $region18: #{tpu_custom_call.1} parent=1 // pred_check
      _
    $region19: #{tpu_custom_call.1} parent=1 // pred_check_branch
      %54 = sbr.rel (0) target = $region21
    $region20: #{tpu_custom_call.1} parent=1 // pred_region
      %s56 = ssub.s32 2048, 2048
      %57 = vsyncadd [#allocation9], %s56
      %s58 = sshll.u32 [#allocation8], 4
      %s59 = int_to_ptr.vmem [resolvable:$true] %s58
      %64 = dma.hbm_to_vmem [thread:$0]  %s4, 2048, %s59, [#allocation9], 128, 128, 8
    $region21: #{tpu_custom_call.1} parent=1 // pred_fallthru
      _
    // Predicated region
    $region22: #{tpu_custom_call.1} parent=1 // pred_check
      _
    $region23: #{tpu_custom_call.1} parent=1 // pred_check_branch
      %66 = sbr.rel (0) target = $region25
    $region24: #{tpu_custom_call.1} parent=1 // pred_region
      %67 = dma.done [#allocation3], 128
    $region25: #{tpu_custom_call.1} parent=1 // pred_fallthru
      _
    // Predicated region
    $region26: #{tpu_custom_call.1} parent=1 // pred_check
      _
    $region27: #{tpu_custom_call.1} parent=1 // pred_check_branch
      %69 = sbr.rel (0) target = $region29
    $region28: #{tpu_custom_call.1} parent=1 // pred_region
      %70 = dma.done [#allocation6], 2048
    $region29: #{tpu_custom_call.1} parent=1 // pred_fallthru
      _
    // Predicated region
    $region30: #{tpu_custom_call.1} parent=1 // pred_check
      _
    $region31: #{tpu_custom_call.1} parent=1 // pred_check_branch
      %72 = sbr.rel (0) target = $region33
    $region32: #{tpu_custom_call.1} parent=1 // pred_region
      %73 = dma.done [#allocation6], 2048
    $region33: #{tpu_custom_call.1} parent=1 // pred_fallthru
      _
    // Predicated region
    $region34: #{tpu_custom_call.1} parent=1 // pred_check
      _
    $region35: #{tpu_custom_call.1} parent=1 // pred_check_branch
      %75 = sbr.rel (0) target = $region37
    $region36: #{tpu_custom_call.1} parent=1 // pred_region
      %76 = dma.done [#allocation9], 2048
    $region37: #{tpu_custom_call.1} parent=1 // pred_fallthru
      _
    %v77 = vld [vmem:[#allocation2] sm:$0xff]
    %v78 = vlaneseq
    %v79 = vand.u32 %v78, 127
    %80 = vset.pattern.permute.xlu0 0
    %81 = vperm.xlu0 %80, %v77
    %v82 = vpop.permute.xlu0 %81
    %vm83 = vcmp.eq.s32.totalorder %v82, %v79
    %v84 = vsel %vm83, 1, 0
    %v85 = vcvt.s32.f32 %v84
    %v86 = vadd.f32 %v85, 0.0
    %87 = vset.pattern.permute.xlu0 1
    %88 = vperm.xlu0 %87, %v77
    %v89 = vpop.permute.xlu0 %88
    %vm90 = vcmp.eq.s32.totalorder %v89, %v79
    %v91 = vsel %vm90, 1, 0
    %v92 = vcvt.s32.f32 %v91
    %v93 = vadd.f32 %v86, %v92
    %94 = vset.pattern.permute.xlu0 2
    %95 = vperm.xlu0 %94, %v77
    %v96 = vpop.permute.xlu0 %95
    %vm97 = vcmp.eq.s32.totalorder %v96, %v79
    %v98 = vsel %vm97, 1, 0
    %v99 = vcvt.s32.f32 %v98
    %v100 = vadd.f32 %v93, %v99
    %101 = vset.pattern.permute.xlu0 3
    %102 = vperm.xlu0 %101, %v77
    %v103 = vpop.permute.xlu0 %102
    %vm104 = vcmp.eq.s32.totalorder %v103, %v79
    %v105 = vsel %vm104, 1, 0
    %v106 = vcvt.s32.f32 %v105
    %v107 = vadd.f32 %v100, %v106
    %108 = vset.pattern.permute.xlu0 4
    %109 = vperm.xlu0 %108, %v77
    %v110 = vpop.permute.xlu0 %109
    %vm111 = vcmp.eq.s32.totalorder %v110, %v79
    %v112 = vsel %vm111, 1, 0
    %v113 = vcvt.s32.f32 %v112
    %v114 = vadd.f32 %v107, %v113
    %115 = vset.pattern.permute.xlu0 5
    %116 = vperm.xlu0 %115, %v77
    %v117 = vpop.permute.xlu0 %116
    %vm118 = vcmp.eq.s32.totalorder %v117, %v79
    %v119 = vsel %vm118, 1, 0
    %v120 = vcvt.s32.f32 %v119
    %v121 = vadd.f32 %v114, %v120
    %122 = vset.pattern.permute.xlu0 6
    %123 = vperm.xlu0 %122, %v77
    %v124 = vpop.permute.xlu0 %123
    %vm125 = vcmp.eq.s32.totalorder %v124, %v79
    %v126 = vsel %vm125, 1, 0
    %v127 = vcvt.s32.f32 %v126
    %v128 = vadd.f32 %v121, %v127
    %129 = vset.pattern.permute.xlu0 7
    %130 = vperm.xlu0 %129, %v77
    %v131 = vpop.permute.xlu0 %130
    %vm132 = vcmp.eq.s32.totalorder %v131, %v79
    %v133 = vsel %vm132, 1, 0
    %v134 = vcvt.s32.f32 %v133
    %v135 = vadd.f32 %v128, %v134
    %v136 = vld [vmem:[#allocation5] sm:$0xff]
    %v137 = vld [vmem:[#allocation5 + $0x8] sm:$0xff]
    %v138 = vld [vmem:[#allocation5 + $0x10] sm:$0xff]
    %v139 = vld [vmem:[#allocation5 + $0x18] sm:$0xff]
    %v140 = vld [vmem:[#allocation5 + $0x20] sm:$0xff]
    %v141 = vld [vmem:[#allocation5 + $0x28] sm:$0xff]
    %v142 = vld [vmem:[#allocation5 + $0x30] sm:$0xff]
    %v143 = vld [vmem:[#allocation5 + $0x38] sm:$0xff]
    %v144 = vld [vmem:[#allocation5 + $0x40] sm:$0xff]
    %v145 = vld [vmem:[#allocation5 + $0x48] sm:$0xff]
    %v146 = vld [vmem:[#allocation5 + $0x50] sm:$0xff]
    %v147 = vld [vmem:[#allocation5 + $0x58] sm:$0xff]
    %v148 = vld [vmem:[#allocation5 + $0x60] sm:$0xff]
    %v149 = vld [vmem:[#allocation5 + $0x68] sm:$0xff]
    %v150 = vld [vmem:[#allocation5 + $0x70] sm:$0xff]
    %v151 = vld [vmem:[#allocation5 + $0x78] sm:$0xff]
    %152 = vmatprep.subr.mxu0 0.0
    %153 = vmatpush1.msra.mxu0 %v136
    %154 = vmatprep.subr.mxu0 0.0
    %155 = vmatpush1.msra.mxu0 %v137
    %156 = vmatprep.subr.mxu0 0.0
    %157 = vmatpush1.msra.mxu0 %v138
    %158 = vmatprep.subr.mxu0 0.0
    %159 = vmatpush1.msra.mxu0 %v139
    %160 = vmatprep.subr.mxu0 0.0
    %161 = vmatpush1.msra.mxu0 %v140
    %162 = vmatprep.subr.mxu0 0.0
    %163 = vmatpush1.msra.mxu0 %v141
    %164 = vmatprep.subr.mxu0 0.0
    %165 = vmatpush1.msra.mxu0 %v142
    %166 = vmatprep.subr.mxu0 0.0
    %167 = vmatpush1.msra.mxu0 %v143
    %168 = vmatprep.subr.mxu0 0.0
    %169 = vmatpush1.msra.mxu0 %v144
    %170 = vmatprep.subr.mxu0 0.0
    %171 = vmatpush1.msra.mxu0 %v145
    %172 = vmatprep.subr.mxu0 0.0
    %173 = vmatpush1.msra.mxu0 %v146
    %174 = vmatprep.subr.mxu0 0.0
    %175 = vmatpush1.msra.mxu0 %v147
    %176 = vmatprep.subr.mxu0 0.0
    %177 = vmatpush1.msra.mxu0 %v148
    %178 = vmatprep.subr.mxu0 0.0
    %179 = vmatpush1.msra.mxu0 %v149
    %180 = vmatprep.subr.mxu0 0.0
    %181 = vmatpush1.msra.mxu0 %v150
    %182 = vmatprep.subr.mxu0 0.0
    %183 = vmatpush1.msra.mxu0 %v151
    %184 = vmatprep.subr.mxu0 0.0
    %185 = vmatpush1.msra.mxu0 0.0
    %186 = vmatprep.subr.mxu0 0.0
    %187 = vmatpush1.msra.mxu0 0.0
    %188 = vmatprep.subr.mxu0 0.0
    %189 = vmatpush1.msra.mxu0 0.0
    %190 = vmatprep.subr.mxu0 0.0
    %191 = vmatpush1.msra.mxu0 0.0
    %192 = vmatprep.subr.mxu0 0.0
    %193 = vmatpush1.msra.mxu0 0.0
    %194 = vmatprep.subr.mxu0 0.0
    %195 = vmatpush1.msra.mxu0 0.0
    %196 = vmatprep.subr.mxu0 0.0
    %197 = vmatpush1.msra.mxu0 0.0
    %198 = vmatprep.subr.mxu0 0.0
    %199 = vmatpush1.msra.mxu0 0.0
    %200 = vmatprep.subr.mxu0 0.0
    %201 = vmatpush1.msra.mxu0 0.0
    %202 = vmatprep.subr.mxu0 0.0
    %203 = vmatpush1.msra.mxu0 0.0
    %204 = vmatprep.subr.mxu0 0.0
    %205 = vmatpush1.msra.mxu0 0.0
    %206 = vmatprep.subr.mxu0 0.0
    %207 = vmatpush1.msra.mxu0 0.0
    %208 = vmatprep.subr.mxu0 0.0
    %209 = vmatpush1.msra.mxu0 0.0
    %210 = vmatprep.subr.mxu0 0.0
    %211 = vmatpush1.msra.mxu0 0.0
    %212 = vmatprep.subr.mxu0 0.0
    %213 = vmatpush1.msra.mxu0 0.0
    %214 = vmatprep.subr.mxu0 0.0
    %215 = vmatpush1.msra.mxu0 0.0
    %216 = vmatprep.mubr.f32.mxu0 0.0
    %217 = vmatmul.mubr.f32.gmra.mrb[0].mxu0 %v135
    %v218 = vpop.f32.mrb[0].mxu0
    %v219 = vadd.f32 0.0, %v218
    %v220 = vpop.f32.mrb[0].mxu0
    %221 = vdwg.mxu0
    %v222 = vmul.f32 %v219, 0.125
    %v223 = vld [vmem:[#allocation7] sm:$0xff]
    %v224 = vld [vmem:[#allocation7 + $0x8] sm:$0xff]
    %v225 = vld [vmem:[#allocation7 + $0x10] sm:$0xff]
    %v226 = vld [vmem:[#allocation7 + $0x18] sm:$0xff]
    %v227 = vld [vmem:[#allocation7 + $0x20] sm:$0xff]
    %v228 = vld [vmem:[#allocation7 + $0x28] sm:$0xff]
    %v229 = vld [vmem:[#allocation7 + $0x30] sm:$0xff]
    %v230 = vld [vmem:[#allocation7 + $0x38] sm:$0xff]
    %v231 = vld [vmem:[#allocation7 + $0x40] sm:$0xff]
    %v232 = vld [vmem:[#allocation7 + $0x48] sm:$0xff]
    %v233 = vld [vmem:[#allocation7 + $0x50] sm:$0xff]
    %v234 = vld [vmem:[#allocation7 + $0x58] sm:$0xff]
    %v235 = vld [vmem:[#allocation7 + $0x60] sm:$0xff]
    %v236 = vld [vmem:[#allocation7 + $0x68] sm:$0xff]
    %v237 = vld [vmem:[#allocation7 + $0x70] sm:$0xff]
    %v238 = vld [vmem:[#allocation7 + $0x78] sm:$0xff]
    %v239 = vld [vmem:[%s3] sm:$0x1]
    %v241 = vlaneseq
    %v242 = vshrl.u32 %v241, 7
    %v243 = vsub.s32 0, %v242
    %v244 = vrot.slane %v239, %v243
    %246 = vmatprep.subr.mxu0 0.0
    %247 = vmatpush1.xpose.msra.mxu0 %v223
    %248 = vmatprep.subr.mxu0 0.0
    %249 = vmatpush1.xpose.msra.mxu0 %v224
    %250 = vmatprep.subr.mxu0 0.0
    %251 = vmatpush1.xpose.msra.mxu0 %v225
    %252 = vmatprep.subr.mxu0 0.0
    %253 = vmatpush1.xpose.msra.mxu0 %v226
    %254 = vmatprep.subr.mxu0 0.0
    %255 = vmatpush1.xpose.msra.mxu0 %v227
    %256 = vmatprep.subr.mxu0 0.0
    %257 = vmatpush1.xpose.msra.mxu0 %v228
    %258 = vmatprep.subr.mxu0 0.0
    %259 = vmatpush1.xpose.msra.mxu0 %v229
    %260 = vmatprep.subr.mxu0 0.0
    %261 = vmatpush1.xpose.msra.mxu0 %v230
    %262 = vmatprep.subr.mxu0 0.0
    %263 = vmatpush1.xpose.msra.mxu0 %v231
    %264 = vmatprep.subr.mxu0 0.0
    %265 = vmatpush1.xpose.msra.mxu0 %v232
    %266 = vmatprep.subr.mxu0 0.0
    %267 = vmatpush1.xpose.msra.mxu0 %v233
    %268 = vmatprep.subr.mxu0 0.0
    %269 = vmatpush1.xpose.msra.mxu0 %v234
    %270 = vmatprep.subr.mxu0 0.0
    %271 = vmatpush1.xpose.msra.mxu0 %v235
    %272 = vmatprep.subr.mxu0 0.0
    %273 = vmatpush1.xpose.msra.mxu0 %v236
    %274 = vmatprep.subr.mxu0 0.0
    %275 = vmatpush1.xpose.msra.mxu0 %v237
    %276 = vmatprep.subr.mxu0 0.0
    %277 = vmatpush1.xpose.msra.mxu0 %v238
    %278 = vmatprep.subr.mxu0 0.0
    %279 = vmatpush1.xpose.msra.mxu0 0.0
    %280 = vmatprep.subr.mxu0 0.0
    %281 = vmatpush1.xpose.msra.mxu0 0.0
    %282 = vmatprep.subr.mxu0 0.0
    %283 = vmatpush1.xpose.msra.mxu0 0.0
    %284 = vmatprep.subr.mxu0 0.0
    %285 = vmatpush1.xpose.msra.mxu0 0.0
    %286 = vmatprep.subr.mxu0 0.0
    %287 = vmatpush1.xpose.msra.mxu0 0.0
    %288 = vmatprep.subr.mxu0 0.0
    %289 = vmatpush1.xpose.msra.mxu0 0.0
    %290 = vmatprep.subr.mxu0 0.0
    %291 = vmatpush1.xpose.msra.mxu0 0.0
    %292 = vmatprep.subr.mxu0 0.0
    %293 = vmatpush1.xpose.msra.mxu0 0.0
    %294 = vmatprep.subr.mxu0 0.0
    %295 = vmatpush1.xpose.msra.mxu0 0.0
    %296 = vmatprep.subr.mxu0 0.0
    %297 = vmatpush1.xpose.msra.mxu0 0.0
    %298 = vmatprep.subr.mxu0 0.0
    %299 = vmatpush1.xpose.msra.mxu0 0.0
    %300 = vmatprep.subr.mxu0 0.0
    %301 = vmatpush1.xpose.msra.mxu0 0.0
    %302 = vmatprep.subr.mxu0 0.0
    %303 = vmatpush1.xpose.msra.mxu0 0.0
    %304 = vmatprep.subr.mxu0 0.0
    %305 = vmatpush1.xpose.msra.mxu0 0.0
    %306 = vmatprep.subr.mxu0 0.0
    %307 = vmatpush1.xpose.msra.mxu0 0.0
    %308 = vmatprep.subr.mxu0 0.0
    %309 = vmatpush1.xpose.msra.mxu0 0.0
    %310 = vmatprep.mubr.f32.mxu0 0.0
    %311 = vmatmul.mubr.f32.gmra.mrb[0].mxu0 %v222
    %v312 = vpop.f32.mrb[0].mxu0
    %v313 = vadd.f32 %v244, %v312
    %v314 = vpop.f32.mrb[0].mxu0
    %315 = vdwg.mxu0
    %316 = vmax.xlane.f32.xlu0 %v313
    %v317 = vpop.xlane.xlu0 %316
    %v318 = vsub.f32 %v313, %v317
    %v319 = vmul.f32 %v318, 1.442695
    %v320 = vpow.pop %v319
    %321 = vadd.xlane.f32.xlu0 %v320
    %v322 = vpop.xlane.xlu0 %321
    %v323 = vrcp.pop %v322
    %v324 = vmul.f32 %v320, %v323
    %v325 = vld [vmem:[#allocation8] sm:$0xff]
    %v326 = vld [vmem:[#allocation8 + $0x8] sm:$0xff]
    %v327 = vld [vmem:[#allocation8 + $0x10] sm:$0xff]
    %v328 = vld [vmem:[#allocation8 + $0x18] sm:$0xff]
    %v329 = vld [vmem:[#allocation8 + $0x20] sm:$0xff]
    %v330 = vld [vmem:[#allocation8 + $0x28] sm:$0xff]
    %v331 = vld [vmem:[#allocation8 + $0x30] sm:$0xff]
    %v332 = vld [vmem:[#allocation8 + $0x38] sm:$0xff]
    %v333 = vld [vmem:[#allocation8 + $0x40] sm:$0xff]
    %v334 = vld [vmem:[#allocation8 + $0x48] sm:$0xff]
    %v335 = vld [vmem:[#allocation8 + $0x50] sm:$0xff]
    %v336 = vld [vmem:[#allocation8 + $0x58] sm:$0xff]
    %v337 = vld [vmem:[#allocation8 + $0x60] sm:$0xff]
    %v338 = vld [vmem:[#allocation8 + $0x68] sm:$0xff]
    %v339 = vld [vmem:[#allocation8 + $0x70] sm:$0xff]
    %v340 = vld [vmem:[#allocation8 + $0x78] sm:$0xff]
    %341 = vmatprep.subr.mxu0 0.0
    %342 = vmatpush1.msra.mxu0 %v325
    %343 = vmatprep.subr.mxu0 0.0
    %344 = vmatpush1.msra.mxu0 %v326
    %345 = vmatprep.subr.mxu0 0.0
    %346 = vmatpush1.msra.mxu0 %v327
    %347 = vmatprep.subr.mxu0 0.0
    %348 = vmatpush1.msra.mxu0 %v328
    %349 = vmatprep.subr.mxu0 0.0
    %350 = vmatpush1.msra.mxu0 %v329
    %351 = vmatprep.subr.mxu0 0.0
    %352 = vmatpush1.msra.mxu0 %v330
    %353 = vmatprep.subr.mxu0 0.0
    %354 = vmatpush1.msra.mxu0 %v331
    %355 = vmatprep.subr.mxu0 0.0
    %356 = vmatpush1.msra.mxu0 %v332
    %357 = vmatprep.subr.mxu0 0.0
    %358 = vmatpush1.msra.mxu0 %v333
    %359 = vmatprep.subr.mxu0 0.0
    %360 = vmatpush1.msra.mxu0 %v334
    %361 = vmatprep.subr.mxu0 0.0
    %362 = vmatpush1.msra.mxu0 %v335
    %363 = vmatprep.subr.mxu0 0.0
    %364 = vmatpush1.msra.mxu0 %v336
    %365 = vmatprep.subr.mxu0 0.0
    %366 = vmatpush1.msra.mxu0 %v337
    %367 = vmatprep.subr.mxu0 0.0
    %368 = vmatpush1.msra.mxu0 %v338
    %369 = vmatprep.subr.mxu0 0.0
    %370 = vmatpush1.msra.mxu0 %v339
    %371 = vmatprep.subr.mxu0 0.0
    %372 = vmatpush1.msra.mxu0 %v340
    %373 = vmatprep.subr.mxu0 0.0
    %374 = vmatpush1.msra.mxu0 0.0
    %375 = vmatprep.subr.mxu0 0.0
    %376 = vmatpush1.msra.mxu0 0.0
    %377 = vmatprep.subr.mxu0 0.0
    %378 = vmatpush1.msra.mxu0 0.0
    %379 = vmatprep.subr.mxu0 0.0
    %380 = vmatpush1.msra.mxu0 0.0
    %381 = vmatprep.subr.mxu0 0.0
    %382 = vmatpush1.msra.mxu0 0.0
    %383 = vmatprep.subr.mxu0 0.0
    %384 = vmatpush1.msra.mxu0 0.0
    %385 = vmatprep.subr.mxu0 0.0
    %386 = vmatpush1.msra.mxu0 0.0
    %387 = vmatprep.subr.mxu0 0.0
    %388 = vmatpush1.msra.mxu0 0.0
    %389 = vmatprep.subr.mxu0 0.0
    %390 = vmatpush1.msra.mxu0 0.0
    %391 = vmatprep.subr.mxu0 0.0
    %392 = vmatpush1.msra.mxu0 0.0
    %393 = vmatprep.subr.mxu0 0.0
    %394 = vmatpush1.msra.mxu0 0.0
    %395 = vmatprep.subr.mxu0 0.0
    %396 = vmatpush1.msra.mxu0 0.0
    %397 = vmatprep.subr.mxu0 0.0
    %398 = vmatpush1.msra.mxu0 0.0
    %399 = vmatprep.subr.mxu0 0.0
    %400 = vmatpush1.msra.mxu0 0.0
    %401 = vmatprep.subr.mxu0 0.0
    %402 = vmatpush1.msra.mxu0 0.0
    %403 = vmatprep.subr.mxu0 0.0
    %404 = vmatpush1.msra.mxu0 0.0
    %405 = vmatprep.mubr.f32.mxu0 0.0
    %406 = vmatmul.mubr.f32.gmra.mrb[0].mxu0 %v324
    %v407 = vpop.f32.mrb[0].mxu0
    %v408 = vadd.f32 0.0, %v407
    %v409 = vpop.f32.mrb[0].mxu0
    %410 = vdwg.mxu0
    %411 = vst [vmem:[#allocation10] sm:$0xff] %v408
    %412 = vst [vmem:[#allocation11] sm:$0xff] %v324
    // Predicated region
    $region38: #{tpu_custom_call.1} parent=1 // pred_check
      _
    $region39: #{tpu_custom_call.1} parent=1 // pred_check_branch
      %414 = sbr.rel (0) target = $region41
    $region40: #{tpu_custom_call.1} parent=1 // pred_region
      %s416 = ssub.s32 128, 128
      %417 = vsyncadd [#allocation4], %s416
      %s419 = sshll.u32 [#allocation10], 4
      %s420 = int_to_ptr.vmem [resolvable:$true] %s419
      %422 = dma.vmem_to_hbm [thread:$0]  %s420, 128, %s5, [#allocation4]
    $region41: #{tpu_custom_call.1} parent=1 // pred_fallthru
      _
    // Predicated region
    $region42: #{tpu_custom_call.1} parent=1 // pred_check
      _
    $region43: #{tpu_custom_call.1} parent=1 // pred_check_branch
      %424 = sbr.rel (0) target = $region45
    $region44: #{tpu_custom_call.1} parent=1 // pred_region
      %s426 = ssub.s32 128, 128
      %427 = vsyncadd [#allocation12], %s426
      %s429 = sshll.u32 [#allocation11], 4
      %s430 = int_to_ptr.vmem [resolvable:$true] %s429
      %432 = dma.vmem_to_hbm [thread:$0]  %s430, 128, %s6, [#allocation12]
    $region45: #{tpu_custom_call.1} parent=1 // pred_fallthru
      _
    // Predicated region
    $region46: #{tpu_custom_call.1} parent=1 // pred_check
      _
    $region47: #{tpu_custom_call.1} parent=1 // pred_check_branch
      %434 = sbr.rel (0) target = $region49
    $region48: #{tpu_custom_call.1} parent=1 // pred_region
      %435 = dma.done [#allocation4], 128
    $region49: #{tpu_custom_call.1} parent=1 // pred_fallthru
      _
    // Predicated region
    $region50: #{tpu_custom_call.1} parent=1 // pred_check
      _
    $region51: #{tpu_custom_call.1} parent=1 // pred_check_branch
      %437 = sbr.rel (0) target = $region53
    $region52: #{tpu_custom_call.1} parent=1 // pred_region
      %438 = dma.done [#allocation12], 128
    $region53: #{tpu_custom_call.1} parent=1 // pred_fallthru
      _
    %439 = vsyncpa [#allocation3], 1
    %440 = vsyncpa [#allocation6], 1
    %441 = vsyncpa [#allocation9], 1
    %442 = vsyncpa [#allocation4], 1
    %443 = vsyncpa [#allocation12], 1

</llo_original>
